<compile_context>
chip_gen: v6e
topology: v6e:2x2x1
jax: 0.10.0
libtpu: 0.0.40
codegen_flags: <defaults>
</compile_context>

<pallas_src>
import jax
import jax.numpy as jnp
from jax.experimental import pallas as pl
from jax.experimental.pallas import tpu as pltpu


def _round_up(x, m):
    return ((x + m - 1) // m) * m


def _cdiv(a, b):
    return -(-a // b)


def _attention_kernel(enc_ref, add_ref, bias_ref, w1_ref, v_ref, out_ref):
    tb, sp, hp = enc_ref.shape

    # One MXU matmul per grid step with a real M dimension: (TB*Sp, Hp)@(Hp, Hp).
    rows = enc_ref[...].reshape(tb * sp, hp)
    ee = jnp.dot(rows, w1_ref[...], preferred_element_type=jnp.float32)

    # add_ref already holds  b1 + hidden @ W2 + b2  per batch; broadcast over seq.
    combined = jnp.tanh(ee.reshape(tb, sp, hp) + add_ref[...])            # (TB,Sp,Hp)

    # energy[b, s] = sum_h combined[b, s, h] * v[h]  (XLU lane reduction over Hp).
    # TODO(synk): if the bundle shows this lane-reduce chain saturating the XLU
    # on v7x after the bf16 switch, move to the transposed (Bp, Hp, Sp) layout
    # so the H reduction becomes sublane/VALU work instead.
    energy = jnp.sum(combined * v_ref[...].reshape(1, 1, hp), axis=-1)    # (TB,Sp)

    # bias: 0 = keep, -1e10 = user mask (exact masked_fill), -inf = seq padding.
    bias = bias_ref[...].reshape(tb, sp)
    energy = jnp.where(bias == 0.0, energy, bias)

    # Softmax along the sequence axis (exact division to hold 1e-5 parity).
    m = jnp.max(energy, axis=-1, keepdims=True)
    e = jnp.exp(energy - m)
    s = jnp.sum(e, axis=-1, keepdims=True)
    out_ref[...] = (e / s).reshape(tb, 1, sp).astype(out_ref.dtype)


def pointer_attention(encoder_outputs, hidden, params, mask=None, *, use_bf16_mxu=False):
    """encoder_outputs: (B, S, H), hidden: (B, 1, H), mask: (B, S) bool or None.

    Weights are stored as (in, out) so the math is x @ W + b (== PyTorch x @ W.T + b).
    Returns (B, S) attention weights (float32).
    """
    B, S, H = encoder_outputs.shape
    w1, b1, w2, b2, v = params
    f32 = jnp.float32
    mxu_dtype = jnp.bfloat16 if use_bf16_mxu else f32
    mxu_bytes = 2 if use_bf16_mxu else 4

    Hp = _round_up(H, 128)   # lane dim of enc / K and N of the matmul
    Sp = _round_up(S, 8)     # sublane dim only -> 8-alignment is sufficient

    # ---- per-generation VMEM limit & TB sizing --------------------------------
    try:
        vmem_cap = int(pltpu.get_tpu_info().vmem_capacity_bytes)
    except Exception:
        vmem_cap = 64 * 1024 * 1024            # conservative (v7x-sized) fallback
    # ~48 MiB on a 64 MiB v7x TensorCore, ~96 MiB on 128 MiB v5e/v6e.
    vmem_limit = min((vmem_cap * 3) // 4, 100 * 1024 * 1024)

    # Per batch row in the block: double-buffered enc tile + ~2x f32 intermediates
    # (ee / combined) + small add/bias/out tiles.
    per_tb = 2 * Sp * Hp * mxu_bytes + 2 * Sp * Hp * 4 + 2 * Hp * 4 + 4 * Sp * 4
    fixed = Hp * Hp * mxu_bytes + Hp * 4       # W1 + v, single-buffered
    budget = (vmem_limit * 6) // 10            # headroom for compiler scratch
    tb_vmem = max(1, (budget - fixed) // per_tb)

    # >= 2 grid steps (ideally >= 4) so the 'parallel' batch axis spans both
    # v7x TensorCores and the enc double buffer has steps to pipeline over.
    min_steps = 1 if B == 1 else min(B, 4)
    target_steps = max(min_steps, _cdiv(B, 8))
    TB = max(1, min(_cdiv(B, target_steps), tb_vmem))
    Bp = _round_up(B, TB)
    # TODO(synk): for very large H (W1 block + enc block exceed the VMEM budget,
    # ~Hp >= 1.5-2k f32 on v7x), add a second 'arbitrary' grid axis tiling W1's
    # output-H dim with a (TB, Sp) f32 partial-energy scratch and run the
    # softmax + store under pl.when on the last H tile.

    pad_b, pad_s, pad_h = Bp - B, Sp - S, Hp - H

    # ---- operand preparation (jnp.pad; skipped entirely when aligned) ---------
    enc_p = encoder_outputs.astype(mxu_dtype)
    if pad_b or pad_s or pad_h:
        enc_p = jnp.pad(enc_p, ((0, pad_b), (0, pad_s), (0, pad_h)))
    # TODO(synk): route the pad/cast producer through allow_input_fusion so it
    # fuses into the pallas_call instead of writing an extra HBM copy of enc.

    w1_p = w1.astype(mxu_dtype)
    if pad_h:
        w1_p = jnp.pad(w1_p, ((0, pad_h), (0, pad_h)))

    v_p = v.astype(f32).reshape(1, H)
    if pad_h:
        v_p = jnp.pad(v_p, ((0, 0), (0, pad_h)))

    # Hoisted decoder projection: one (B,H)@(H,H) matmul; fold both biases so the
    # kernel performs a single broadcast add.
    dec_add = (hidden.reshape(B, H).astype(f32) @ w2.astype(f32)
               + b2.astype(f32) + b1.astype(f32))                        # (B, H)
    add_p = dec_add.reshape(B, 1, H)
    if pad_b or pad_h:
        add_p = jnp.pad(add_p, ((0, pad_b), (0, 0), (0, pad_h)))

    # Fill-bias plane: 0 keep / -1e10 user mask / -inf seq padding.
    # Padded batch rows keep 0 at s < S so their (discarded) softmax stays finite.
    seq_bias = jnp.where(jnp.arange(Sp) < S, 0.0, -jnp.inf).astype(f32)   # (Sp,)
    bias = jnp.broadcast_to(seq_bias[None, :], (Bp, Sp))
    if mask is not None:
        user = jnp.where(mask.reshape(B, S), jnp.float32(-1e10), jnp.float32(0.0))
        if pad_b or pad_s:
            user = jnp.pad(user, ((0, pad_b), (0, pad_s)))
        bias = jnp.minimum(bias, user)
    bias = bias.reshape(Bp, 1, Sp)

    grid = Bp // TB
    out = pl.pallas_call(
        _attention_kernel,
        out_shape=jax.ShapeDtypeStruct((Bp, 1, Sp), f32),
        grid_spec=pltpu.PrefetchScalarGridSpec(
            num_scalar_prefetch=0,
            grid=(grid,),
            in_specs=[
                pl.BlockSpec((TB, Sp, Hp), lambda b: (b, 0, 0)),   # encoder rows
                pl.BlockSpec((TB, 1, Hp), lambda b: (b, 0, 0)),    # per-batch add term
                pl.BlockSpec((TB, 1, Sp), lambda b: (b, 0, 0)),    # mask/pad fill bias
                pl.BlockSpec((Hp, Hp), lambda b: (0, 0),           # W1 (constant block)
                             pipeline_mode=pl.Buffered(1)),
                pl.BlockSpec((1, Hp), lambda b: (0, 0),            # v   (constant block)
                             pipeline_mode=pl.Buffered(1)),
            ],
            out_specs=pl.BlockSpec((TB, 1, Sp), lambda b: (b, 0, 0)),
        ),
        compiler_params=pltpu.CompilerParams(
            dimension_semantics=("parallel",),
            vmem_limit_bytes=int(vmem_limit),
        ),
    )(enc_p, add_p, bias, w1_p, v_p)

    return out[:B, 0, :S]


def reference_attention(encoder_outputs, hidden, params, mask=None):
    """Pure-JAX reference mirroring the PyTorch forward."""
    w1, b1, w2, b2, v = params
    B, S, H = encoder_outputs.shape
    encoder_energy = encoder_outputs @ w1 + b1                  # (B, S, H)
    decoder_energy = (hidden.reshape(B, H) @ w2 + b2)[:, None]  # (B, 1, H)
    combined = jnp.tanh(encoder_energy + decoder_energy)
    energy = (combined @ v.reshape(H, 1))[..., 0]               # (B, S)
    if mask is not None:
        energy = jnp.where(mask, -1e10, energy)
    return jax.nn.softmax(energy, axis=-1)


if __name__ == "__main__":
    hidden_size = 15
    B, S, H = 2, 8, hidden_size

    key = jax.random.PRNGKey(0)
    k_enc, k_hid, k_w1, k_b1, k_w2, k_b2, k_v = jax.random.split(key, 7)

    encoder_outputs = jax.random.normal(k_enc, (B, S, H), dtype=jnp.float32)
    hidden = jax.random.normal(k_hid, (B, 1, H), dtype=jnp.float32)

    # Deterministic parameter init (shapes match nn.Linear(H,H), nn.Linear(H,1, bias=False)).
    scale = 1.0 / (H ** 0.5)
    w1 = jax.random.uniform(k_w1, (H, H), jnp.float32, -scale, scale)   # (in, out)
    b1 = jax.random.uniform(k_b1, (H,), jnp.float32, -scale, scale)
    w2 = jax.random.uniform(k_w2, (H, H), jnp.float32, -scale, scale)
    b2 = jax.random.uniform(k_b2, (H,), jnp.float32, -scale, scale)
    v = jax.random.uniform(k_v, (H,), jnp.float32, -scale, scale)
    params = (w1, b1, w2, b2, v)

    # Mask: mask out the last two positions of batch 0 (True == masked).
    mask = jnp.zeros((B, S), dtype=bool).at[0, -2:].set(True)

    # Exact f32 path (default): 1e-5 parity with the reference.
    attn = jax.block_until_ready(pointer_attention(encoder_outputs, hidden, params, mask=mask))
    ref = reference_attention(encoder_outputs, hidden, params, mask=mask)
    assert attn.shape == (B, S)
    assert jnp.allclose(attn, ref, rtol=1e-5, atol=1e-5), "mismatch vs reference (f32, mask)"

    # No-mask path.
    attn2 = jax.block_until_ready(pointer_attention(encoder_outputs, hidden, params))
    ref2 = reference_attention(encoder_outputs, hidden, params)
    assert jnp.allclose(attn2, ref2, rtol=1e-5, atol=1e-5), "mismatch vs reference (f32, no mask)"

    # Gated bf16 MXU path (enc + W1 in bf16, f32 accumulation) with looser tolerance.
    attn3 = jax.block_until_ready(
        pointer_attention(encoder_outputs, hidden, params, mask=mask, use_bf16_mxu=True))
    assert jnp.allclose(attn3, ref, rtol=2e-2, atol=2e-2), "mismatch vs reference (bf16 path)"

    print("KERNEL_OK")
</pallas_src>

<mosaic_0001>
module attributes {stable_mosaic.version = 11 : i64} {
  func.func @_attention_kernel(%arg0: i32, %arg1: memref<1x8x128xf32, #tpu.memory_space<vmem>>, %arg2: memref<1x1x128xf32, #tpu.memory_space<vmem>>, %arg3: memref<1x1x8xf32, #tpu.memory_space<vmem>>, %arg4: memref<128x128xf32, #tpu.memory_space<vmem>>, %arg5: memref<1x128xf32, #tpu.memory_space<vmem>>, %arg6: memref<1x1x8xf32, #tpu.memory_space<vmem>>) attributes {dimension_semantics = [#tpu.dimension_semantics<parallel>], iteration_bounds = array<i64: 2>, scalar_prefetch = 0 : i64, scratch_operands = 0 : i64, tpu.core_type = #tpu.core_type<tc>, window_params = [{transform_indices = @transform_0, window_bounds = array<i64: 1, 8, 128>}, {transform_indices = @transform_1, window_bounds = array<i64: 1, 1, 128>}, {transform_indices = @transform_2, window_bounds = array<i64: 1, 1, 8>}, {pipeline_mode = #tpu.pipeline_mode<synchronous>, transform_indices = @transform_3, window_bounds = array<i64: 128, 128>}, {pipeline_mode = #tpu.pipeline_mode<synchronous>, transform_indices = @transform_4, window_bounds = array<i64: 1, 128>}, {transform_indices = @transform_5, window_bounds = array<i64: 1, 1, 8>}]} {
    %c0 = arith.constant 0 : index
    %c0_0 = arith.constant 0 : index
    %c0_1 = arith.constant 0 : index
    %0 = vector.load %arg1[%c0, %c0_0, %c0_1] : memref<1x8x128xf32, #tpu.memory_space<vmem>>, vector<1x8x128xf32>
    %1 = vector.shape_cast %0 : vector<1x8x128xf32> to vector<8x128xf32>
    %c0_2 = arith.constant 0 : index
    %c0_3 = arith.constant 0 : index
    %2 = vector.load %arg4[%c0_2, %c0_3] : memref<128x128xf32, #tpu.memory_space<vmem>>, vector<128x128xf32>
    %cst = arith.constant dense<0.000000e+00> : vector<8x128xf32>
    %3 = tpu.matmul %1, %2, %cst {dimension_numbers = #tpu.dot_dimension_numbers<[1], [0], [0], [1], [0, 0, 1, 1], [], []>} : vector<8x128xf32>, vector<128x128xf32>, vector<8x128xf32> -> vector<8x128xf32>
    %4 = vector.shape_cast %3 : vector<8x128xf32> to vector<1x8x128xf32>
    %c0_4 = arith.constant 0 : index
    %c0_5 = arith.constant 0 : index
    %c0_6 = arith.constant 0 : index
    %5 = vector.load %arg2[%c0_4, %c0_5, %c0_6] : memref<1x1x128xf32, #tpu.memory_space<vmem>>, vector<1x1x128xf32>
    %6 = vector.broadcast %5 : vector<1x1x128xf32> to vector<1x8x128xf32>
    %7 = arith.addf %4, %6 : vector<1x8x128xf32>
    %8 = math.tanh %7 : vector<1x8x128xf32>
    %c0_7 = arith.constant 0 : index
    %c0_8 = arith.constant 0 : index
    %9 = vector.load %arg5[%c0_7, %c0_8] : memref<1x128xf32, #tpu.memory_space<vmem>>, vector<1x128xf32>
    %10 = vector.shape_cast %9 : vector<1x128xf32> to vector<1x1x128xf32>
    %11 = vector.broadcast %10 : vector<1x1x128xf32> to vector<1x8x128xf32>
    %12 = arith.mulf %8, %11 : vector<1x8x128xf32>
    %cst_9 = arith.constant dense<0.000000e+00> : vector<1x8xf32>
    %13 = vector.multi_reduction <add>, %12, %cst_9 [2] : vector<1x8x128xf32> to vector<1x8xf32>
    %c0_10 = arith.constant 0 : index
    %c0_11 = arith.constant 0 : index
    %c0_12 = arith.constant 0 : index
    %14 = vector.load %arg3[%c0_10, %c0_11, %c0_12] : memref<1x1x8xf32, #tpu.memory_space<vmem>>, vector<1x1x8xf32>
    %15 = vector.shape_cast %14 : vector<1x1x8xf32> to vector<1x8xf32>
    %cst_13 = arith.constant 0.000000e+00 : f32
    %16 = vector.broadcast %cst_13 : f32 to vector<1x8xf32>
    %17 = arith.cmpf oeq, %15, %16 : vector<1x8xf32>
    %18 = arith.select %17, %13, %15 : vector<1x8xi1>, vector<1x8xf32>
    %cst_14 = arith.constant dense<0xFF800000> : vector<1xf32>
    %19 = vector.multi_reduction <maximumf>, %18, %cst_14 [1] : vector<1x8xf32> to vector<1xf32>
    %20 = vector.shape_cast %19 : vector<1xf32> to vector<1x1xf32>
    %21 = vector.broadcast %20 : vector<1x1xf32> to vector<1x8xf32>
    %22 = arith.subf %18, %21 : vector<1x8xf32>
    %23 = math.exp %22 : vector<1x8xf32>
    %cst_15 = arith.constant dense<0.000000e+00> : vector<1xf32>
    %24 = vector.multi_reduction <add>, %23, %cst_15 [1] : vector<1x8xf32> to vector<1xf32>
    %25 = vector.shape_cast %24 : vector<1xf32> to vector<1x1xf32>
    %26 = vector.broadcast %25 : vector<1x1xf32> to vector<1x8xf32>
    %27 = arith.divf %23, %26 : vector<1x8xf32>
    %28 = vector.shape_cast %27 : vector<1x8xf32> to vector<1x1x8xf32>
    %c0_16 = arith.constant 0 : index
    %c0_17 = arith.constant 0 : index
    %c0_18 = arith.constant 0 : index
    %29 = vector.load %arg6[%c0_16, %c0_17, %c0_18] : memref<1x1x8xf32, #tpu.memory_space<vmem>>, vector<1x1x8xf32>
    tpu.vector_store %arg6[%c0_16, %c0_17, %c0_18], %28 {strides = array<i32>} : memref<1x1x8xf32, #tpu.memory_space<vmem>>, vector<1x1x8xf32>,
    return
  }
  func.func @transform_0(%arg0: i32) -> (i32, i32, i32) {
    %c0_i32 = arith.constant 0 : i32
    %c0_i32_0 = arith.constant 0 : i32
    %c0_i32_1 = arith.constant 0 : i32
    return %arg0, %c0_i32, %c0_i32_0 : i32, i32, i32
  }
  func.func @transform_1(%arg0: i32) -> (i32, i32, i32) {
    %c0_i32 = arith.constant 0 : i32
    %c0_i32_0 = arith.constant 0 : i32
    %c0_i32_1 = arith.constant 0 : i32
    return %arg0, %c0_i32, %c0_i32_0 : i32, i32, i32
  }
  func.func @transform_2(%arg0: i32) -> (i32, i32, i32) {
    %c0_i32 = arith.constant 0 : i32
    %c0_i32_0 = arith.constant 0 : i32
    %c0_i32_1 = arith.constant 0 : i32
    return %arg0, %c0_i32, %c0_i32_0 : i32, i32, i32
  }
  func.func @transform_3(%arg0: i32) -> (i32, i32) {
    %c0_i32 = arith.constant 0 : i32
    %c0_i32_0 = arith.constant 0 : i32
    %c0_i32_1 = arith.constant 0 : i32
    return %c0_i32, %c0_i32_0 : i32, i32
  }
  func.func @transform_4(%arg0: i32) -> (i32, i32) {
    %c0_i32 = arith.constant 0 : i32
    %c0_i32_0 = arith.constant 0 : i32
    %c0_i32_1 = arith.constant 0 : i32
    return %c0_i32, %c0_i32_0 : i32, i32
  }
  func.func @transform_5(%arg0: i32) -> (i32, i32, i32) {
    %c0_i32 = arith.constant 0 : i32
    %c0_i32_0 = arith.constant 0 : i32
    %c0_i32_1 = arith.constant 0 : i32
    return %arg0, %c0_i32, %c0_i32_0 : i32, i32, i32
  }
}

</mosaic_0001>

<llo_original>
// kernel: tpu_custom_call.1
$region0: #{tpu_custom_call.1}
  #allocation0 [shape = 'u32[]', space=smem, size = 0x4, offset = 0x4, fixed_abs, tag = 'smem constant byte address 0x4 - core index']
  #allocation1 [shape = 'u32[144,128]{1,0:T(1,128)}', space=vmem, size = 0x12000, scoped, tag = 'internal scratch']
  %s0 = inlined_call_operand.hbm [shape: f32[2,8,128], index: 0, kind: input, shape index: {}]
  %s1 = inlined_call_operand.hbm [shape: f32[2,1,128], index: 1, kind: input, shape index: {}]
  %s2 = inlined_call_operand.vmem [shape: f32[2,1,8], index: 2, kind: input, shape index: {}]
  %s3 = inlined_call_operand.hbm [shape: f32[128,128], index: 3, kind: input, shape index: {}]
  %s4 = inlined_call_operand.vmem [shape: f32[1,128], index: 4, kind: input, shape index: {}]
  %s5 = inlined_call_operand.hbm [shape: f32[2,1,8], index: 5, kind: output, shape index: {}]
  %s6 = sld [smem:[#allocation0]]
  $region65: #{tpu_custom_call.1} parent=0
    _
  %s8 = ssub.s32 1, %s6
  %s9 = scalar_select 0, %s8, %s6
  $region1: #{tpu_custom_call.1} parent=0
    #allocation2 [shape = 'u8[8192]{0}', space=vmem, size = 0x2000, scoped, tag = 'input window, operand 0']
    #allocation3 [shape = 's32[2]{0}', space=sflag, size = 0x8, scoped, tag = 'scoped memory for tpu_custom_call.1']
    #allocation4 [shape = 's32[2]{0}', space=sflag, size = 0x8, scoped, tag = 'scoped memory for tpu_custom_call.1']
    #allocation5 [shape = 'u8[1024]{0}', space=vmem, size = 0x400, scoped, tag = 'input window, operand 1']
    #allocation6 [shape = 's32[2]{0}', space=sflag, size = 0x8, scoped, tag = 'scoped memory for tpu_custom_call.1']
    #allocation7 [shape = 'u8[65536]{0}', space=vmem, size = 0x10000, scoped, tag = 'input window, operand 3, single buffered']
    #allocation8 [shape = 'u8[1024]{0}', space=vmem, size = 0x400, scoped, tag = 'output window, operand 0']
    %10 = vsyncpa [#allocation3], 0
    %s11 = scalar_lea.sflag [#allocation3], 1
    %12 = vsyncpa %s11, 0
    %13 = vsyncpa [#allocation6], 0
    %s14 = scalar_lea.sflag [#allocation6], 1
    %15 = vsyncpa %s14, 0
    %16 = vsyncpa [#allocation4], 0
    %s17 = scalar_lea.sflag [#allocation4], 1
    %18 = vsyncpa %s17, 0
    loop: start=0, step=1, limit=4
    $region2: #{tpu_custom_call.1} parent=1 // loop_pre_header
      _
    $region3: #{tpu_custom_call.1} parent=1 // loop_header
      %s20 = sphi 0, %s24
      %p21 = scmp.ge.s32.totalorder %s20, 4
      %s30 = sphi 0, %s32
      %s33 = sphi 0, %s30
      %s34 = sphi 0, %s33
      %s50 = sphi 0, %s34
      %s56 = sphi 0, %s58
      %s59 = sphi 0, %s56
      %s60 = sphi 0, %s59
      %s76 = sphi 0, %s60
      %s82 = sphi 0, %s84
      %s85 = sphi 0, %s82
      %s86 = sphi 0, %s85
      %s102 = sphi 0, %s86
      %s106 = sphi 0, %s106
      %s108 = sphi 0, %s106
      %s109 = sphi 0, %s108
      %s123 = sphi 0, %s109
      %s127 = sphi 0, %s127
      %s129 = sphi 0, %s127
      %s130 = sphi 0, %s129
      %s144 = sphi 0, %s130
      %s150 = sphi 0, %s152
      %s153 = sphi 0, %s150
      %s154 = sphi 0, %s153
      %s170 = sphi 0, %s154
    $region4: #{tpu_custom_call.1} parent=1 // loop_header_branch
      %23 = sbr.rel (%p21) target = $region8
    $region5: #{tpu_custom_call.1} parent=1 // loop_body
      %s25 = ssub.s32 %s20, 1
      %s26 = ssub.s32 %s20, 2
      %s27 = sadd.s32 %s20, 1
      %s28 = ssub.s32 %s20, %s27
      %p29 = scmp.eq.s32.totalorder %s28, 0
      %s31 = sadd.s32 %s30, 1
      %s32 = scalar_select %p29, %s30, %s31
      %p35 = pneg %p29
      %p36 = scmp.eq.s32.totalorder %s20, 1
      %p37 = por %p35, %p36
      %p38 = scmp.ne.s32.totalorder %s30, %s33
      %p39 = scmp.eq.s32.totalorder %s20, 0
      %p40 = por %p38, %p39
      %p41 = scmp.ne.s32.totalorder %s30, %s33
      %p42 = scmp.eq.s32.totalorder %s25, 1
      %p43 = por %p41, %p42
      %p44 = scmp.ne.s32.totalorder %s33, %s34
      %p45 = scmp.eq.s32.totalorder %s25, 0
      %p46 = por %p44, %p45
      %p47 = scmp.ne.s32.totalorder %s33, %s34
      %p48 = scmp.eq.s32.totalorder %s26, 1
      %p49 = por %p47, %p48
      %p51 = scmp.ne.s32.totalorder %s34, %s50
      %p52 = scmp.eq.s32.totalorder %s26, 0
      %p53 = por %p51, %p52
      %s54 = ssub.s32 %s20, %s27
      %p55 = scmp.eq.s32.totalorder %s54, 0
      %s57 = sadd.s32 %s56, 1
      %s58 = scalar_select %p55, %s56, %s57
      %p61 = pneg %p55
      %p62 = scmp.eq.s32.totalorder %s20, 1
      %p63 = por %p61, %p62
      %p64 = scmp.ne.s32.totalorder %s56, %s59
      %p65 = scmp.eq.s32.totalorder %s20, 0
      %p66 = por %p64, %p65
      %p67 = scmp.ne.s32.totalorder %s56, %s59
      %p68 = scmp.eq.s32.totalorder %s25, 1
      %p69 = por %p67, %p68
      %p70 = scmp.ne.s32.totalorder %s59, %s60
      %p71 = scmp.eq.s32.totalorder %s25, 0
      %p72 = por %p70, %p71
      %p73 = scmp.ne.s32.totalorder %s59, %s60
      %p74 = scmp.eq.s32.totalorder %s26, 1
      %p75 = por %p73, %p74
      %p77 = scmp.ne.s32.totalorder %s60, %s76
      %p78 = scmp.eq.s32.totalorder %s26, 0
      %p79 = por %p77, %p78
      %s80 = ssub.s32 %s20, %s27
      %p81 = scmp.eq.s32.totalorder %s80, 0
      %s83 = sadd.s32 %s82, 1
      %s84 = scalar_select %p81, %s82, %s83
      %p87 = pneg %p81
      %p88 = scmp.eq.s32.totalorder %s20, 1
      %p89 = por %p87, %p88
      %p90 = scmp.ne.s32.totalorder %s82, %s85
      %p91 = scmp.eq.s32.totalorder %s20, 0
      %p92 = por %p90, %p91
      %p93 = scmp.ne.s32.totalorder %s82, %s85
      %p94 = scmp.eq.s32.totalorder %s25, 1
      %p95 = por %p93, %p94
      %p96 = scmp.ne.s32.totalorder %s85, %s86
      %p97 = scmp.eq.s32.totalorder %s25, 0
      %p98 = por %p96, %p97
      %p99 = scmp.ne.s32.totalorder %s85, %s86
      %p100 = scmp.eq.s32.totalorder %s26, 1
      %p101 = por %p99, %p100
      %p103 = scmp.ne.s32.totalorder %s86, %s102
      %p104 = scmp.eq.s32.totalorder %s26, 0
      %p105 = por %p103, %p104
      %s107 = sadd.s32 %s106, 1
      %p110 = scmp.eq.s32.totalorder %s20, 1
      %p111 = scmp.ne.s32.totalorder %s106, %s108
      %p112 = scmp.eq.s32.totalorder %s20, 0
      %p113 = por %p111, %p112
      %p114 = scmp.ne.s32.totalorder %s106, %s108
      %p115 = scmp.eq.s32.totalorder %s25, 1
      %p116 = por %p114, %p115
      %p117 = scmp.ne.s32.totalorder %s108, %s109
      %p118 = scmp.eq.s32.totalorder %s25, 0
      %p119 = por %p117, %p118
      %p120 = scmp.ne.s32.totalorder %s108, %s109
      %p121 = scmp.eq.s32.totalorder %s26, 1
      %p122 = por %p120, %p121
      %p124 = scmp.ne.s32.totalorder %s109, %s123
      %p125 = scmp.eq.s32.totalorder %s26, 0
      %p126 = por %p124, %p125
      %s128 = sadd.s32 %s127, 1
      %p131 = scmp.eq.s32.totalorder %s20, 1
      %p132 = scmp.ne.s32.totalorder %s127, %s129
      %p133 = scmp.eq.s32.totalorder %s20, 0
      %p134 = por %p132, %p133
      %p135 = scmp.ne.s32.totalorder %s127, %s129
      %p136 = scmp.eq.s32.totalorder %s25, 1
      %p137 = por %p135, %p136
      %p138 = scmp.ne.s32.totalorder %s129, %s130
      %p139 = scmp.eq.s32.totalorder %s25, 0
      %p140 = por %p138, %p139
      %p141 = scmp.ne.s32.totalorder %s129, %s130
      %p142 = scmp.eq.s32.totalorder %s26, 1
      %p143 = por %p141, %p142
      %p145 = scmp.ne.s32.totalorder %s130, %s144
      %p146 = scmp.eq.s32.totalorder %s26, 0
      %p147 = por %p145, %p146
      %s148 = ssub.s32 %s20, %s27
      %p149 = scmp.eq.s32.totalorder %s148, 0
      %s151 = sadd.s32 %s150, 1
      %s152 = scalar_select %p149, %s150, %s151
      %p155 = pneg %p149
      %p156 = scmp.eq.s32.totalorder %s20, 1
      %p157 = por %p155, %p156
      %p158 = scmp.ne.s32.totalorder %s150, %s153
      %p159 = scmp.eq.s32.totalorder %s20, 0
      %p160 = por %p158, %p159
      %p161 = scmp.ne.s32.totalorder %s150, %s153
      %p162 = scmp.eq.s32.totalorder %s25, 1
      %p163 = por %p161, %p162
      %p164 = scmp.ne.s32.totalorder %s153, %s154
      %p165 = scmp.eq.s32.totalorder %s25, 0
      %p166 = por %p164, %p165
      %p167 = scmp.ne.s32.totalorder %s153, %s154
      %p168 = scmp.eq.s32.totalorder %s26, 1
      %p169 = por %p167, %p168
      %p171 = scmp.ne.s32.totalorder %s154, %s170
      %p172 = scmp.eq.s32.totalorder %s26, 0
      %p173 = por %p171, %p172
      %p174 = scmp.le.s32.totalorder 1, %s20
      %p175 = scmp.lt.s32.totalorder %s20, 3
      %p176 = pnand %p174, %p175
      %p177 = pneg %p176
      // Predicated region
      $region9: #{tpu_custom_call.1} parent=5 // pred_check
        _
      $region10: #{tpu_custom_call.1} parent=5 // pred_check_branch
        %179 = sbr.rel (%p176) target = $region12
      $region11: #{tpu_custom_call.1} parent=5 // pred_region
        %s180 = ssub.s32 %s20, 1
        // Predicated region
        $region13: #{tpu_custom_call.1} parent=11 // pred_check
          %p181 = pneg %p119
        $region14: #{tpu_custom_call.1} parent=11 // pred_check_branch
          %183 = sbr.rel (%p181) target = $region16
        $region15: #{tpu_custom_call.1} parent=11 // pred_region
          %s185 = ssub.s32 2048, 2048
          %186 = vsyncadd [#allocation6], %s185
          %s187 = sshll.u32 [#allocation7], 4
          %s188 = int_to_ptr.vmem [resolvable:$true] %s187
          %193 = dma.hbm_to_vmem [thread:$0]  %s3, 2048, %s188, [#allocation6], 128, 128, 8
        $region16: #{tpu_custom_call.1} parent=11 // pred_fallthru
          _
        // Predicated region
        $region17: #{tpu_custom_call.1} parent=11 // pred_check
          %p194 = pneg %p140
        $region18: #{tpu_custom_call.1} parent=11 // pred_check_branch
          %196 = sbr.rel (%p194) target = $region20
        $region19: #{tpu_custom_call.1} parent=11 // pred_region
          _
        $region20: #{tpu_custom_call.1} parent=11 // pred_fallthru
          _
      $region12: #{tpu_custom_call.1} parent=5 // pred_fallthru
        _
      %p197 = scmp.lt.s32.totalorder %s20, 2
      // Predicated region
      $region21: #{tpu_custom_call.1} parent=5 // pred_check
        %p198 = pneg %p197
      $region22: #{tpu_custom_call.1} parent=5 // pred_check_branch
        %200 = sbr.rel (%p198) target = $region24
      $region23: #{tpu_custom_call.1} parent=5 // pred_region
        // Predicated region
        $region25: #{tpu_custom_call.1} parent=23 // pred_check
          %p201 = pneg %p40
        $region26: #{tpu_custom_call.1} parent=23 // pred_check_branch
          %203 = sbr.rel (%p201) target = $region28
        $region27: #{tpu_custom_call.1} parent=23 // pred_region
          %s204 = sand.u32 %s30, 1
          %s205 = scalar_lea.sflag [#allocation3], %s204
          %s206 = sand.u32 %s30, 1
          %s207 = smul.addr %s206, 8
          %s208 = scalar_lea.vmem [#allocation2], %s207
          %s210 = ssub.s32 128, 128
          %211 = vsyncadd %s205, %s210
          %s212 = smul.addr %s20, 128
          %s213 = scalar_lea.hbm %s0, %s212
          %s215 = sshll.u32 %s208, 4
          %s216 = int_to_ptr.vmem [resolvable:$true] %s215
          %218 = dma.hbm_to_vmem [thread:$0]  %s213, 128, %s216, %s205
        $region28: #{tpu_custom_call.1} parent=23 // pred_fallthru
          _
        // Predicated region
        $region29: #{tpu_custom_call.1} parent=23 // pred_check
          %p219 = pneg %p66
        $region30: #{tpu_custom_call.1} parent=23 // pred_check_branch
          %221 = sbr.rel (%p219) target = $region32
        $region31: #{tpu_custom_call.1} parent=23 // pred_region
          %s222 = sand.u32 %s20, 1
          %s223 = scalar_lea.sflag [#allocation6], %s222
          %s224 = sand.u32 %s56, 1
          %s225 = scalar_lea.vmem [#allocation5], %s224
          %s227 = ssub.s32 16, 16
          %228 = vsyncadd %s223, %s227
          %s229 = smul.addr %s20, 16
          %s230 = scalar_lea.hbm %s1, %s229
          %s232 = sshll.u32 %s225, 4
          %s233 = int_to_ptr.vmem [resolvable:$true] %s232
          %235 = dma.hbm_to_vmem [thread:$0]  %s230, 16, %s233, %s223
        $region32: #{tpu_custom_call.1} parent=23 // pred_fallthru
          _
        // Predicated region
        $region33: #{tpu_custom_call.1} parent=23 // pred_check
          %p236 = pneg %p92
        $region34: #{tpu_custom_call.1} parent=23 // pred_check_branch
          %238 = sbr.rel (%p236) target = $region36
        $region35: #{tpu_custom_call.1} parent=23 // pred_region
          %p239 = scmp.lt.s32.totalorder %s20, 1
          %s240 = scalar_select %p239, %s20, 1
          %s241 = scalar_lea.vmem %s2, %s240
        $region36: #{tpu_custom_call.1} parent=23 // pred_fallthru
          _
      $region24: #{tpu_custom_call.1} parent=5 // pred_fallthru
        _
      %p242 = scmp.le.s32.totalorder 1, %s20
      %p243 = scmp.lt.s32.totalorder %s20, 3
      %p244 = pnand %p242, %p243
      %p245 = pneg %p244
      // Predicated region
      $region37: #{tpu_custom_call.1} parent=5 // pred_check
        _
      $region38: #{tpu_custom_call.1} parent=5 // pred_check_branch
        %247 = sbr.rel (%p244) target = $region40
      $region39: #{tpu_custom_call.1} parent=5 // pred_region
        %s248 = ssub.s32 %s20, 1
        %s249 = sand.u32 %s33, 1
        %s250 = scalar_lea.sflag [#allocation3], %s249
        %s251 = sand.u32 %s33, 1
        %s252 = smul.addr %s251, 8
        %s253 = scalar_lea.vmem [#allocation2], %s252
        // Predicated region
        $region41: #{tpu_custom_call.1} parent=39 // pred_check
          %p254 = pneg %p46
        $region42: #{tpu_custom_call.1} parent=39 // pred_check_branch
          %256 = sbr.rel (%p254) target = $region44
        $region43: #{tpu_custom_call.1} parent=39 // pred_region
          %257 = dma.done %s250, 128
        $region44: #{tpu_custom_call.1} parent=39 // pred_fallthru
          _
        %s258 = sand.u32 %s25, 1
        %s259 = scalar_lea.sflag [#allocation6], %s258
        %s260 = sand.u32 %s59, 1
        %s261 = scalar_lea.vmem [#allocation5], %s260
        // Predicated region
        $region45: #{tpu_custom_call.1} parent=39 // pred_check
          %p262 = pneg %p72
        $region46: #{tpu_custom_call.1} parent=39 // pred_check_branch
          %264 = sbr.rel (%p262) target = $region48
        $region47: #{tpu_custom_call.1} parent=39 // pred_region
          %265 = dma.done %s259, 16
        $region48: #{tpu_custom_call.1} parent=39 // pred_fallthru
          _
        // Predicated region
        $region49: #{tpu_custom_call.1} parent=39 // pred_check
          %p266 = pneg %p119
        $region50: #{tpu_custom_call.1} parent=39 // pred_check_branch
          %268 = sbr.rel (%p266) target = $region52
        $region51: #{tpu_custom_call.1} parent=39 // pred_region
          %269 = dma.done [#allocation6], 2048
        $region52: #{tpu_custom_call.1} parent=39 // pred_fallthru
          _
        %s270 = sand.u32 %s33, 1
        %s271 = scalar_lea.sflag [#allocation3], %s270
        %s272 = sand.u32 %s33, 1
        %s273 = smul.addr %s272, 8
        %s274 = scalar_lea.vmem [#allocation2], %s273
        %p275 = pneg %p46
        %p276 = pneg %p43
        %s277 = sand.u32 %s25, 1
        %s278 = scalar_lea.sflag [#allocation6], %s277
        %s279 = sand.u32 %s59, 1
        %s280 = scalar_lea.vmem [#allocation5], %s279
        %p281 = pneg %p72
        %p282 = pneg %p69
        %p283 = scmp.lt.s32.totalorder %s25, 1
        %s284 = scalar_select %p283, %s25, 1
        %s285 = scalar_lea.vmem %s2, %s284
        %p286 = pneg %p98
        %p287 = pneg %p95
        %p288 = pneg %p119
        %p289 = pneg %p116
        %p290 = pneg %p140
        %p291 = pneg %p137
        %p292 = pneg %p166
        %p293 = pneg %p163
        %s294 = sand.u32 %s153, 1
        %s295 = scalar_lea.sflag [#allocation4], %s294
        %s296 = sand.u32 %s153, 1
        %s297 = scalar_lea.vmem [#allocation8], %s296
        %p298 = scmp.lt.s32.totalorder %s25, 1
        %s299 = scalar_select %p298, %s25, 1
        %s300 = scalar_lea.vmem %s2, %s299
        %v301 = vld [vmem:[%s253] sm:$0xff]
        %v302 = vld [vmem:[#allocation7] sm:$0xff]
        %v303 = vld [vmem:[#allocation7 + $0x8] sm:$0xff]
        %v304 = vld [vmem:[#allocation7 + $0x10] sm:$0xff]
        %v305 = vld [vmem:[#allocation7 + $0x18] sm:$0xff]
        %v306 = vld [vmem:[#allocation7 + $0x20] sm:$0xff]
        %v307 = vld [vmem:[#allocation7 + $0x28] sm:$0xff]
        %v308 = vld [vmem:[#allocation7 + $0x30] sm:$0xff]
        %v309 = vld [vmem:[#allocation7 + $0x38] sm:$0xff]
        %v310 = vld [vmem:[#allocation7 + $0x40] sm:$0xff]
        %v311 = vld [vmem:[#allocation7 + $0x48] sm:$0xff]
        %v312 = vld [vmem:[#allocation7 + $0x50] sm:$0xff]
        %v313 = vld [vmem:[#allocation7 + $0x58] sm:$0xff]
        %v314 = vld [vmem:[#allocation7 + $0x60] sm:$0xff]
        %v315 = vld [vmem:[#allocation7 + $0x68] sm:$0xff]
        %v316 = vld [vmem:[#allocation7 + $0x70] sm:$0xff]
        %v317 = vld [vmem:[#allocation7 + $0x78] sm:$0xff]
        %318 = vmatprep.subr.mxu0 0.0
        %319 = vmatpush1.msra.mxu0 %v317
        %320 = vmatprep.subr.mxu0 0.0
        %321 = vmatpush1.msra.mxu0 %v316
        %322 = vmatprep.subr.mxu0 0.0
        %323 = vmatpush1.msra.mxu0 %v315
        %324 = vmatprep.subr.mxu0 0.0
        %325 = vmatpush1.msra.mxu0 %v314
        %326 = vmatprep.subr.mxu0 0.0
        %327 = vmatpush1.msra.mxu0 %v313
        %328 = vmatprep.subr.mxu0 0.0
        %329 = vmatpush1.msra.mxu0 %v312
        %330 = vmatprep.subr.mxu0 0.0
        %331 = vmatpush1.msra.mxu0 %v311
        %332 = vmatprep.subr.mxu0 0.0
        %333 = vmatpush1.msra.mxu0 %v310
        %334 = vmatprep.subr.mxu0 0.0
        %335 = vmatpush1.msra.mxu0 %v309
        %336 = vmatprep.subr.mxu0 0.0
        %337 = vmatpush1.msra.mxu0 %v308
        %338 = vmatprep.subr.mxu0 0.0
        %339 = vmatpush1.msra.mxu0 %v307
        %340 = vmatprep.subr.mxu0 0.0
        %341 = vmatpush1.msra.mxu0 %v306
        %342 = vmatprep.subr.mxu0 0.0
        %343 = vmatpush1.msra.mxu0 %v305
        %344 = vmatprep.subr.mxu0 0.0
        %345 = vmatpush1.msra.mxu0 %v304
        %346 = vmatprep.subr.mxu0 0.0
        %347 = vmatpush1.msra.mxu0 %v303
        %348 = vmatprep.subr.mxu0 0.0
        %349 = vmatpush1.msra.mxu0 %v302
        %350 = vmatprep.subr.mxu0 0.0
        %351 = vmatpush2.msra.mxu0 0.0
        %352 = vmatprep.subr.mxu0 0.0
        %353 = vmatpush2.msra.mxu0 0.0
        %354 = vmatprep.subr.mxu0 0.0
        %355 = vmatpush2.msra.mxu0 0.0
        %356 = vmatprep.subr.mxu0 0.0
        %357 = vmatpush2.msra.mxu0 0.0
        %358 = vmatprep.subr.mxu0 0.0
        %359 = vmatpush2.msra.mxu0 0.0
        %360 = vmatprep.subr.mxu0 0.0
        %361 = vmatpush2.msra.mxu0 0.0
        %362 = vmatprep.subr.mxu0 0.0
        %363 = vmatpush2.msra.mxu0 0.0
        %364 = vmatprep.subr.mxu0 0.0
        %365 = vmatpush2.msra.mxu0 0.0
        %366 = vmatprep.subr.mxu0 0.0
        %367 = vmatpush2.msra.mxu0 0.0
        %368 = vmatprep.subr.mxu0 0.0
        %369 = vmatpush2.msra.mxu0 0.0
        %370 = vmatprep.subr.mxu0 0.0
        %371 = vmatpush2.msra.mxu0 0.0
        %372 = vmatprep.subr.mxu0 0.0
        %373 = vmatpush2.msra.mxu0 0.0
        %374 = vmatprep.subr.mxu0 0.0
        %375 = vmatpush2.msra.mxu0 0.0
        %376 = vmatprep.subr.mxu0 0.0
        %377 = vmatpush2.msra.mxu0 0.0
        %378 = vmatprep.subr.mxu0 0.0
        %379 = vmatpush2.msra.mxu0 0.0
        %380 = vmatprep.subr.mxu0 0.0
        %381 = vmatpush2.msra.mxu0 0.0
        %382 = vmatprep.mubr.f32.mxu0 0.0
        %383 = vmatmul.mubr.f32.gmra.mxu0 %v301
        %v384 = vpop.f32.mrf.mxu0
        %v385 = vadd.f32 0.0, %v384
        %v386 = vpop.f32.mrf.mxu0
        %387 = vdwg.mxu0
        %v388 = vld [vmem:[%s261] sm:$0x1]
        %v390 = vlaneseq
        %v391 = vshrl.u32 %v390, 7
        %v392 = vsub.s32 0, %v391
        %v393 = vrot.slane %v388, %v392
        %v395 = vadd.f32 %v385, %v393
        %v396 = vtanh.pop %v395
        %v397 = vld [vmem:[%s4] sm:$0x1]
        %v399 = vlaneseq
        %v400 = vshrl.u32 %v399, 7
        %v401 = vsub.s32 0, %v400
        %v402 = vrot.slane %v397, %v401
        %v404 = vmul.f32 %v396, %v402
        %405 = vadd.xlane.f32.xlu0 %v404
        %v406 = vpop.xlane.xlu0 %405
        %v407 = vld [vmem:[%s300] sm:$0x1]
        %vm408 = vcmp.eq.f32.partialorder %v407, 0.0
        %v410 = vlaneseq
        %v411 = vshrl.u32 %v410, 7
        %v412 = vsub.s32 0, %v411
        %v413 = vrot.slane %v406, %v412
        %v414 = vlaneseq
        %v415 = vshrl.u32 %v414, 7
        %v416 = vsub.s32 1, %v415
        %v417 = vrot.slane %v406, %v416
        %v418 = vlaneseq
        %v419 = vshrl.u32 %v418, 7
        %v420 = vsub.s32 2, %v419
        %v421 = vrot.slane %v406, %v420
        %v422 = vlaneseq
        %v423 = vshrl.u32 %v422, 7
        %v424 = vsub.s32 3, %v423
        %v425 = vrot.slane %v406, %v424
        %v426 = vlaneseq
        %v427 = vshrl.u32 %v426, 7
        %v428 = vsub.s32 4, %v427
        %v429 = vrot.slane %v406, %v428
        %v430 = vlaneseq
        %v431 = vshrl.u32 %v430, 7
        %v432 = vsub.s32 5, %v431
        %v433 = vrot.slane %v406, %v432
        %v434 = vlaneseq
        %v435 = vshrl.u32 %v434, 7
        %v436 = vsub.s32 6, %v435
        %v437 = vrot.slane %v406, %v436
        %v438 = vlaneseq
        %v439 = vshrl.u32 %v438, 7
        %v440 = vsub.s32 7, %v439
        %v441 = vrot.slane %v406, %v440
        %v442 = vcombine.low %v413, %v417
        %v443 = vcombine.low %v421, %v425
        %v444 = vcombine.low %v429, %v433
        %v445 = vcombine.low %v437, %v441
        %v447 = vunpack.c.l.s4 1966171168
        %v448 = vunpack.c.0.s8 %v447
        %v449 = vlaneseq
        %v450 = vshrl.u32 %v449, 7
        %v451 = vsub.s32 %v448, %v450
        %v452 = vrot.slane %v442, %v451
        %v454 = vunpack.c.l.s4 1966171168
        %v455 = vunpack.c.0.s8 %v454
        %v456 = vlaneseq
        %v457 = vshrl.u32 %v456, 7
        %v458 = vsub.s32 %v455, %v457
        %v459 = vrot.slane %v443, %v458
        %v461 = vunpack.c.l.s4 1966171168
        %v462 = vunpack.c.0.s8 %v461
        %v463 = vlaneseq
        %v464 = vshrl.u32 %v463, 7
        %v465 = vsub.s32 %v462, %v464
        %v466 = vrot.slane %v444, %v465
        %v468 = vunpack.c.l.s4 1966171168
        %v469 = vunpack.c.0.s8 %v468
        %v470 = vlaneseq
        %v471 = vshrl.u32 %v470, 7
        %v472 = vsub.s32 %v469, %v471
        %v473 = vrot.slane %v445, %v472
        %v474 = vcombine.low %v452, %v459
        %v475 = vcombine.low %v466, %v473
        %v477 = vunpack.c.l.s4 1966171168
        %v478 = vunpack.c.0.s8 %v477
        %v479 = vlaneseq
        %v480 = vshrl.u32 %v479, 7
        %v481 = vsub.s32 %v478, %v480
        %v482 = vrot.slane %v474, %v481
        %v484 = vunpack.c.l.s4 1966171168
        %v485 = vunpack.c.0.s8 %v484
        %v486 = vlaneseq
        %v487 = vshrl.u32 %v486, 7
        %v488 = vsub.s32 %v485, %v487
        %v489 = vrot.slane %v475, %v488
        %v490 = vcombine.low %v482, %v489
        %491 = vset.pattern.permute.xlu0 0
        %492 = vperm.xlu0 %491, %v490
        %v493 = vpop.permute.xlu0 %492
        %v494 = vlaneseq
        %v495 = vand.u32 %v494, 127
        %v496 = vlaneseq
        %v497 = vshrl.u32 %v496, 7
        %v498 = vsub.s32 %v495, %v497
        %v499 = vrot.slane %v493, %v498
        %v501 = vunpack.c.l.s4 1966171168
        %v502 = vunpack.c.0.s8 %v501
        %v503 = vlaneseq
        %v504 = vshrl.u32 %v503, 7
        %v505 = vsub.s32 %v502, %v504
        %v506 = vrot.slane %v499, %v505
        %v508 = vunpack.c.l.s4 1966171168
        %v509 = vunpack.c.0.s8 %v508
        %v510 = vlaneseq
        %v511 = vshrl.u32 %v510, 7
        %v512 = vsub.s32 %v509, %v511
        %v513 = vrot.slane %v506, %v512
        %v515 = vsel %vm408, %v513, %v407
        %vm516 = vcmask 57344
        %v517 = vsel %vm516, %v515, -inf
        %518 = vmax.xlane.f32.xlu0 %v517
        %v519 = vpop.xlane.xlu0 %518
        %v520 = vsub.f32 %v515, %v519
        %v521 = vmul.f32 %v520, 1.442695
        %v522 = vpow.pop %v521
        %v523 = vsel %vm516, %v522, 0.0
        %524 = vadd.xlane.f32.xlu0 %v523
        %v525 = vpop.xlane.xlu0 %524
        %v526 = vrcp.pop %v525
        %v527 = vmul.f32 %v522, %v526
        %528 = vst.msk [vmem:[%s297] sm:$0x1] %vm516, %v527
        %s529 = sand.u32 %s153, 1
        %s530 = scalar_lea.sflag [#allocation4], %s529
        %s531 = sand.u32 %s153, 1
        %s532 = scalar_lea.vmem [#allocation8], %s531
        // Predicated region
        $region53: #{tpu_custom_call.1} parent=39 // pred_check
          %p533 = pneg %p163
        $region54: #{tpu_custom_call.1} parent=39 // pred_check_branch
          %535 = sbr.rel (%p533) target = $region56
        $region55: #{tpu_custom_call.1} parent=39 // pred_region
          %s537 = ssub.s32 16, 16
          %538 = vsyncadd %s530, %s537
          %s539 = smul.addr %s25, 16
          %s540 = scalar_lea.hbm %s5, %s539
          %s542 = sshll.u32 %s532, 4
          %s543 = int_to_ptr.vmem [resolvable:$true] %s542
          %545 = dma.vmem_to_hbm [thread:$0]  %s543, 16, %s540, %s530
        $region56: #{tpu_custom_call.1} parent=39 // pred_fallthru
          _
      $region40: #{tpu_custom_call.1} parent=5 // pred_fallthru
        _
      %p546 = scmp.le.s32.totalorder 2, %s20
      // Predicated region
      $region57: #{tpu_custom_call.1} parent=5 // pred_check
        %p547 = pneg %p546
      $region58: #{tpu_custom_call.1} parent=5 // pred_check_branch
        %549 = sbr.rel (%p547) target = $region60
      $region59: #{tpu_custom_call.1} parent=5 // pred_region
        %s550 = ssub.s32 %s20, 2
        // Predicated region
        $region61: #{tpu_custom_call.1} parent=59 // pred_check
          %p551 = pneg %p169
        $region62: #{tpu_custom_call.1} parent=59 // pred_check_branch
          %553 = sbr.rel (%p551) target = $region64
        $region63: #{tpu_custom_call.1} parent=59 // pred_region
          %s554 = sand.u32 %s154, 1
          %s555 = scalar_lea.sflag [#allocation4], %s554
          %s556 = sand.u32 %s154, 1
          %s557 = scalar_lea.vmem [#allocation8], %s556
          %558 = dma.done %s555, 16
        $region64: #{tpu_custom_call.1} parent=59 // pred_fallthru
          _
      $region60: #{tpu_custom_call.1} parent=5 // pred_fallthru
        _
    $region6: #{tpu_custom_call.1} parent=1 // loop_footer
      %s24 = sadd.s32 1, %s20
    $region7: #{tpu_custom_call.1} parent=1 // loop_footer_branch
      %19 = sbr.rel target = $region3
    $region8: #{tpu_custom_call.1} parent=1 // loop_exit
      _
    %559 = vsyncpa [#allocation3], 1
    %s560 = scalar_lea.sflag [#allocation3], 1
    %561 = vsyncpa %s560, 1
    %562 = vsyncpa [#allocation6], 1
    %s563 = scalar_lea.sflag [#allocation6], 1
    %564 = vsyncpa %s563, 1
    %565 = vsyncpa [#allocation4], 1
    %s566 = scalar_lea.sflag [#allocation4], 1
    %567 = vsyncpa %s566, 1

</llo_original>
